<compile_context>
chip_gen: v7x
topology: tpu7x:2x2x1
jax: 0.10.0
libtpu: 0.0.40
codegen_flags: <defaults>
</compile_context>

<pallas_src>
import jax
import jax.numpy as jnp
from jax.experimental import pallas as pl
from jax.experimental.pallas import tpu as pltpu

# ---- problem constants (from the PyTorch module) ----
C_IN, C_OUT = 22, 13
K, STRIDE, PAD = 5, 23, 22
H = W = 16
OH = (H + 2 * PAD - K) // STRIDE + 1   # = 3
OW = (W + 2 * PAD - K) // STRIDE + 1   # = 3
CKK = C_IN * K * K                      # = 550
CKK_PAD = ((CKK + 127) // 128) * 128    # = 640, lane-aligned contraction length

# ---- static geometry analysis (plain Python, done once at import time) ----
_ACTIVE = [
    (oh, ow)
    for oh in range(OH)
    for ow in range(OW)
    if max(oh * STRIDE - PAD, 0) < min(oh * STRIDE - PAD + K, H)
    and max(ow * STRIDE - PAD, 0) < min(ow * STRIDE - PAD + K, W)
]
assert _ACTIVE == [(1, 1)], _ACTIVE              # only the center position sees real data
_R0 = 1 * STRIDE - PAD                            # = 1
_C0 = 1 * STRIDE - PAD                            # = 1
assert 0 <= _R0 and _R0 + K <= H and 0 <= _C0 and _C0 + K <= W   # fully interior window
CENTER_COL = 1 * OW + 1                           # flattened output index of (1, 1) -> 4


def _conv_gelu_kernel(patch_ref, w_ref, b_ref, o_ref):
    """patch_ref: (1, CKK_PAD) center receptive field (zero-padded lanes),
    w_ref: (C_OUT, CKK_PAD), b_ref: (C_OUT, 1), o_ref: (C_OUT, OH*OW).

    v1[:, CENTER_COL] = w . patch + b ; v1 elsewhere = b (pure-padding windows)
    out = 0.5 * v1 * (tanh(0.7978845608028654 * (v1 + 0.044715 * v1^3)) + 1)
    """
    # Single 550-long contraction: VPU multiply + XLU lane reduce (no MXU).
    center = jnp.sum(w_ref[...] * patch_ref[...], axis=-1, keepdims=True)   # (C_OUT, 1)

    col = jax.lax.broadcasted_iota(jnp.int32, (C_OUT, OH * OW), 1)
    v1 = b_ref[...] + jnp.where(col == CENTER_COL, center, 0.0)             # (C_OUT, 9)

    # exact elementwise chain from the PyTorch module
    v2 = v1 * 0.5
    v3 = v1 * v1
    v4 = v3 * v1
    v5 = v4 * 0.044715
    v6 = v1 + v5
    v7 = v6 * 0.7978845608028654
    v8 = jnp.tanh(v7)
    v9 = v8 + 1.0
    o_ref[...] = v2 * v9


@jax.jit
def conv_gelu_forward(x, weight, bias):
    """x: (1, C_IN, H, W) f32 NCHW; weight: (C_OUT, C_IN, K, K); bias: (C_OUT,)."""
    # All glue below is fused into this single jitted program (one dispatch).
    patch = x[0, :, _R0:_R0 + K, _C0:_C0 + K].reshape(1, CKK)   # (1, 550)
    patch = jnp.pad(patch, ((0, 0), (0, CKK_PAD - CKK)))        # lane-align to 640
    w_mat = weight.reshape(C_OUT, CKK)                          # (13, 550), no transpose
    w_mat = jnp.pad(w_mat, ((0, 0), (0, CKK_PAD - CKK)))
    b_col = bias.reshape(C_OUT, 1)                              # (13, 1)

    out_t = pl.pallas_call(
        _conv_gelu_kernel,
        out_shape=jax.ShapeDtypeStruct((C_OUT, OH * OW), jnp.float32),
        in_specs=[
            pl.BlockSpec(memory_space=pltpu.MemorySpace.VMEM),
            pl.BlockSpec(memory_space=pltpu.MemorySpace.VMEM),
            pl.BlockSpec(memory_space=pltpu.MemorySpace.VMEM),
        ],
        out_specs=pl.BlockSpec(memory_space=pltpu.MemorySpace.VMEM),
    )(patch, w_mat, b_col)

    # (C_OUT, OH*OW) -> (1, C_OUT, OH, OW): pure reshape, no transpose needed.
    return out_t.reshape(1, C_OUT, OH, OW)


def _reference(x, weight, bias):
    """Pure-JAX reference (lax conv + tanh-GELU chain) for correctness check."""
    v1 = jax.lax.conv_general_dilated(
        x, weight, window_strides=(STRIDE, STRIDE),
        padding=[(PAD, PAD), (PAD, PAD)],
        dimension_numbers=("NCHW", "OIHW", "NCHW"),
    ) + bias.reshape(1, C_OUT, 1, 1)
    v2 = v1 * 0.5
    v7 = (v1 + (v1 * v1 * v1) * 0.044715) * 0.7978845608028654
    return v2 * (jnp.tanh(v7) + 1.0)


if __name__ == "__main__":
    key = jax.random.PRNGKey(0)
    kx, kw, kb = jax.random.split(key, 3)

    x = jax.random.uniform(kx, (1, C_IN, H, W), dtype=jnp.float32)
    # deterministic "Kaiming-ish" init for the synthetic conv parameters
    fan_in = C_IN * K * K
    bound = 1.0 / (fan_in ** 0.5)
    weight = jax.random.uniform(kw, (C_OUT, C_IN, K, K), dtype=jnp.float32,
                                minval=-bound, maxval=bound)
    bias = jax.random.uniform(kb, (C_OUT,), dtype=jnp.float32,
                              minval=-bound, maxval=bound)

    out = jax.block_until_ready(conv_gelu_forward(x, weight, bias))
    ref = jax.block_until_ready(_reference(x, weight, bias))

    assert out.shape == (1, C_OUT, OH, OW), out.shape
    assert jnp.allclose(out, ref, atol=1e-5, rtol=1e-5), "mismatch vs reference"

    print("KERNEL_OK")
</pallas_src>

<mosaic_0001>
module attributes {stable_mosaic.version = 11 : i64} {
  func.func @_conv_gelu_kernel(%arg0: memref<1x640xf32, #tpu.memory_space<vmem>>, %arg1: memref<13x640xf32, #tpu.memory_space<vmem>>, %arg2: memref<13x1xf32, #tpu.memory_space<vmem>>, %arg3: memref<13x9xf32, #tpu.memory_space<vmem>>) attributes {dimension_semantics = [], scalar_prefetch = 0 : i64, scratch_operands = 0 : i64, tpu.core_type = #tpu.core_type<tc>} {
    %c0 = arith.constant 0 : index
    %c0_0 = arith.constant 0 : index
    %0 = vector.load %arg1[%c0, %c0_0] : memref<13x640xf32, #tpu.memory_space<vmem>>, vector<13x640xf32>
    %c0_1 = arith.constant 0 : index
    %c0_2 = arith.constant 0 : index
    %1 = vector.load %arg0[%c0_1, %c0_2] : memref<1x640xf32, #tpu.memory_space<vmem>>, vector<1x640xf32>
    %2 = vector.broadcast %1 : vector<1x640xf32> to vector<13x640xf32>
    %3 = arith.mulf %0, %2 : vector<13x640xf32>
    %cst = arith.constant dense<0.000000e+00> : vector<13xf32>
    %4 = vector.multi_reduction <add>, %3, %cst [1] : vector<13x640xf32> to vector<13xf32>
    %5 = vector.shape_cast %4 : vector<13xf32> to vector<13x1xf32>
    %6 = tpu.iota {dimensions = array<i32: 1>} : vector<13x9xi32>
    %c0_3 = arith.constant 0 : index
    %c0_4 = arith.constant 0 : index
    %7 = vector.load %arg2[%c0_3, %c0_4] : memref<13x1xf32, #tpu.memory_space<vmem>>, vector<13x1xf32>
    %c4_i32 = arith.constant 4 : i32
    %8 = vector.broadcast %c4_i32 : i32 to vector<13x9xi32>
    %9 = arith.cmpi eq, %6, %8 : vector<13x9xi32>
    %cst_5 = arith.constant 0.000000e+00 : f32
    %10 = vector.shape_cast %5 : vector<13x1xf32> to vector<13x1xf32>
    %11 = vector.broadcast %10 : vector<13x1xf32> to vector<13x9xf32>
    %12 = vector.broadcast %cst_5 : f32 to vector<13x9xf32>
    %13 = arith.select %9, %11, %12 : vector<13x9xi1>, vector<13x9xf32>
    %14 = vector.broadcast %7 : vector<13x1xf32> to vector<13x9xf32>
    %15 = arith.addf %14, %13 : vector<13x9xf32>
    %cst_6 = arith.constant 5.000000e-01 : f32
    %16 = vector.broadcast %cst_6 : f32 to vector<13x9xf32>
    %17 = arith.mulf %15, %16 : vector<13x9xf32>
    %18 = arith.mulf %15, %15 : vector<13x9xf32>
    %19 = arith.mulf %18, %15 : vector<13x9xf32>
    %cst_7 = arith.constant 4.471500e-02 : f32
    %20 = vector.broadcast %cst_7 : f32 to vector<13x9xf32>
    %21 = arith.mulf %19, %20 : vector<13x9xf32>
    %22 = arith.addf %15, %21 : vector<13x9xf32>
    %cst_8 = arith.constant 0.797884583 : f32
    %23 = vector.broadcast %cst_8 : f32 to vector<13x9xf32>
    %24 = arith.mulf %22, %23 : vector<13x9xf32>
    %25 = math.tanh %24 : vector<13x9xf32>
    %cst_9 = arith.constant 1.000000e+00 : f32
    %26 = vector.broadcast %cst_9 : f32 to vector<13x9xf32>
    %27 = arith.addf %25, %26 : vector<13x9xf32>
    %28 = arith.mulf %17, %27 : vector<13x9xf32>
    %c0_10 = arith.constant 0 : index
    %c0_11 = arith.constant 0 : index
    %29 = vector.load %arg3[%c0_10, %c0_11] : memref<13x9xf32, #tpu.memory_space<vmem>>, vector<13x9xf32>
    tpu.vector_store %arg3[%c0_10, %c0_11], %28 {strides = array<i32>} : memref<13x9xf32, #tpu.memory_space<vmem>>, vector<13x9xf32>,
    return
  }
}

</mosaic_0001>

<llo_original>
// kernel: squeeze.1
$region0: #{squeeze.1}
  %s0 = inlined_call_operand.vmem [shape: f32[1,22,5,5], index: 0, kind: input, shape index: {}]
  %s1 = inlined_call_operand.vmem [shape: f32[1,550], index: 1, kind: output, shape index: {}]
  $region1: #{squeeze.1} parent=0
    #allocation0 [shape = 'u8[20480]{0}', space=vmem, size = 0x5000, scoped, tag = 'scoped mem for output reshape']
    %v2 = vld [vmem:[%s0] sm:$0x1]
    %vm3 = vcmask 39936
    %4 = vst.msk [vmem:[#allocation0] sm:$0x1] %vm3, %v2
    %s5 = scalar_lea.vmem %s0, 81
    %v6 = vld [vmem:[%s5] sm:$0x1]
    %s7 = scalar_lea.vmem %s0, 81
    %v8 = vld [vmem:[%s7] sm:$0x1]
    %vm9 = vcmask 7168
    %v10 = vsel %vm9, %v8, %v6
    %11 = vrot.lane.b32.xlu0 %v10, 127
    %v12 = vpop.permute.xlu0 %11
    %vm13 = vcmask 31744
    %s14 = scalar_lea.vmem [#allocation0], 16
    %15 = vst.msk [vmem:[%s14] sm:$0x1] %vm13, %v12
    %vm16 = vcmask 1048568
    %s17 = scalar_lea.vmem [#allocation0], 8
    %18 = vst.msk [vmem:[%s17] sm:$0x1] %vm16, %v12
    %s19 = scalar_lea.vmem %s0, 162
    %v20 = vld [vmem:[%s19] sm:$0x1]
    %s21 = scalar_lea.vmem %s0, 162
    %v22 = vld [vmem:[%s21] sm:$0x1]
    %vm23 = vcmask 15360
    %v24 = vsel %vm23, %v22, %v20
    %25 = vrot.lane.b32.xlu0 %v24, 126
    %v26 = vpop.permute.xlu0 %25
    %vm27 = vcmask 23552
    %s28 = scalar_lea.vmem [#allocation0], 32
    %29 = vst.msk [vmem:[%s28] sm:$0x1] %vm27, %v26
    %vm30 = vcmask 1048560
    %s31 = scalar_lea.vmem [#allocation0], 24
    %32 = vst.msk [vmem:[%s31] sm:$0x1] %vm30, %v26
    %s33 = scalar_lea.vmem %s0, 40
    %v34 = vld [vmem:[%s33] sm:$0x1]
    %s35 = scalar_lea.vmem %s0, 40
    %v36 = vld [vmem:[%s35] sm:$0x1]
    %vm37 = vcmask 23552
    %v38 = vsel %vm37, %v36, %v34
    %39 = vrot.lane.b32.xlu0 %v38, 125
    %v40 = vpop.permute.xlu0 %39
    %vm41 = vcmask 15360
    %s42 = scalar_lea.vmem [#allocation0], 8
    %43 = vst.msk [vmem:[%s42] sm:$0x1] %vm41, %v40
    %vm44 = vcmask 1048552
    %45 = vst.msk [vmem:[#allocation0] sm:$0x1] %vm44, %v40
    %s46 = scalar_lea.vmem %s0, 121
    %v47 = vld [vmem:[%s46] sm:$0x1]
    %s48 = scalar_lea.vmem %s0, 121
    %v49 = vld [vmem:[%s48] sm:$0x1]
    %vm50 = vcmask 31744
    %v51 = vsel %vm50, %v49, %v47
    %52 = vrot.lane.b32.xlu0 %v51, 124
    %v53 = vpop.permute.xlu0 %52
    %vm54 = vcmask 7168
    %s55 = scalar_lea.vmem [#allocation0], 24
    %56 = vst.msk [vmem:[%s55] sm:$0x1] %vm54, %v53
    %vm57 = vcmask 1048544
    %s58 = scalar_lea.vmem [#allocation0], 16
    %59 = vst.msk [vmem:[%s58] sm:$0x1] %vm57, %v53
    %s60 = scalar_lea.vmem %s0, 80
    %v61 = vld [vmem:[%s60] sm:$0x1]
    %62 = vrot.lane.b32.xlu0 %v61, 122
    %v63 = vpop.permute.xlu0 %62
    %vm64 = vcmask 1040336
    %s65 = scalar_lea.vmem [#allocation0], 8
    %66 = vst.msk [vmem:[%s65] sm:$0x1] %vm64, %v63
    %s67 = scalar_lea.vmem %s0, 161
    %v68 = vld [vmem:[%s67] sm:$0x1]
    %69 = vrot.lane.b32.xlu0 %v68, 121
    %v70 = vpop.permute.xlu0 %69
    %vm71 = vcmask 1032136
    %s72 = scalar_lea.vmem [#allocation0], 24
    %73 = vst.msk [vmem:[%s72] sm:$0x1] %vm71, %v70
    %s74 = scalar_lea.vmem %s0, 36
    %v75 = vld [vmem:[%s74] sm:$0x1]
    %76 = vrot.lane.b32.xlu0 %v75, 120
    %v77 = vpop.permute.xlu0 %76
    %vm78 = vcmask 1023936
    %79 = vst.msk [vmem:[#allocation0] sm:$0x1] %vm78, %v77
    %s80 = scalar_lea.vmem %s0, 120
    %v81 = vld [vmem:[%s80] sm:$0x1]
    %82 = vrot.lane.b32.xlu0 %v81, 119
    %v83 = vpop.permute.xlu0 %82
    %vm84 = vcmask 1015736
    %s85 = scalar_lea.vmem [#allocation0], 16
    %86 = vst.msk [vmem:[%s85] sm:$0x1] %vm84, %v83
    %s87 = scalar_lea.vmem %s0, 76
    %v88 = vld [vmem:[%s87] sm:$0x1]
    %89 = vrot.lane.b32.xlu0 %v88, 117
    %v90 = vpop.permute.xlu0 %89
    %vm91 = vcmask 999336
    %s92 = scalar_lea.vmem [#allocation0], 8
    %93 = vst.msk [vmem:[%s92] sm:$0x1] %vm91, %v90
    %s94 = scalar_lea.vmem %s0, 160
    %v95 = vld [vmem:[%s94] sm:$0x1]
    %96 = vrot.lane.b32.xlu0 %v95, 116
    %v97 = vpop.permute.xlu0 %96
    %vm98 = vcmask 991136
    %s99 = scalar_lea.vmem [#allocation0], 24
    %100 = vst.msk [vmem:[%s99] sm:$0x1] %vm98, %v97
    %s101 = scalar_lea.vmem %s0, 35
    %v102 = vld [vmem:[%s101] sm:$0x1]
    %103 = vrot.lane.b32.xlu0 %v102, 115
    %v104 = vpop.permute.xlu0 %103
    %vm105 = vcmask 982936
    %106 = vst.msk [vmem:[#allocation0] sm:$0x1] %vm105, %v104
    %s107 = scalar_lea.vmem %s0, 116
    %v108 = vld [vmem:[%s107] sm:$0x1]
    %109 = vrot.lane.b32.xlu0 %v108, 114
    %v110 = vpop.permute.xlu0 %109
    %vm111 = vcmask 974736
    %s112 = scalar_lea.vmem [#allocation0], 16
    %113 = vst.msk [vmem:[%s112] sm:$0x1] %vm111, %v110
    %s114 = scalar_lea.vmem %s0, 75
    %v115 = vld [vmem:[%s114] sm:$0x1]
    %116 = vrot.lane.b32.xlu0 %v115, 112
    %v117 = vpop.permute.xlu0 %116
    %vm118 = vcmask 958336
    %s119 = scalar_lea.vmem [#allocation0], 8
    %120 = vst.msk [vmem:[%s119] sm:$0x1] %vm118, %v117
    %s121 = scalar_lea.vmem %s0, 156
    %v122 = vld [vmem:[%s121] sm:$0x1]
    %123 = vrot.lane.b32.xlu0 %v122, 111
    %v124 = vpop.permute.xlu0 %123
    %vm125 = vcmask 950136
    %s126 = scalar_lea.vmem [#allocation0], 24
    %127 = vst.msk [vmem:[%s126] sm:$0x1] %vm125, %v124
    %s128 = scalar_lea.vmem %s0, 34
    %v129 = vld [vmem:[%s128] sm:$0x1]
    %130 = vrot.lane.b32.xlu0 %v129, 110
    %v131 = vpop.permute.xlu0 %130
    %vm132 = vcmask 941936
    %133 = vst.msk [vmem:[#allocation0] sm:$0x1] %vm132, %v131
    %s134 = scalar_lea.vmem %s0, 115
    %v135 = vld [vmem:[%s134] sm:$0x1]
    %136 = vrot.lane.b32.xlu0 %v135, 109
    %v137 = vpop.permute.xlu0 %136
    %vm138 = vcmask 933736
    %s139 = scalar_lea.vmem [#allocation0], 16
    %140 = vst.msk [vmem:[%s139] sm:$0x1] %vm138, %v137
    %s141 = scalar_lea.vmem %s0, 74
    %v142 = vld [vmem:[%s141] sm:$0x1]
    %143 = vrot.lane.b32.xlu0 %v142, 107
    %v144 = vpop.permute.xlu0 %143
    %vm145 = vcmask 917336
    %s146 = scalar_lea.vmem [#allocation0], 8
    %147 = vst.msk [vmem:[%s146] sm:$0x1] %vm145, %v144
    %s148 = scalar_lea.vmem %s0, 155
    %v149 = vld [vmem:[%s148] sm:$0x1]
    %150 = vrot.lane.b32.xlu0 %v149, 106
    %v151 = vpop.permute.xlu0 %150
    %vm152 = vcmask 909136
    %s153 = scalar_lea.vmem [#allocation0], 24
    %154 = vst.msk [vmem:[%s153] sm:$0x1] %vm152, %v151
    %s155 = scalar_lea.vmem %s0, 33
    %v156 = vld [vmem:[%s155] sm:$0x1]
    %157 = vrot.lane.b32.xlu0 %v156, 105
    %v158 = vpop.permute.xlu0 %157
    %vm159 = vcmask 900936
    %160 = vst.msk [vmem:[#allocation0] sm:$0x1] %vm159, %v158
    %s161 = scalar_lea.vmem %s0, 114
    %v162 = vld [vmem:[%s161] sm:$0x1]
    %163 = vrot.lane.b32.xlu0 %v162, 104
    %v164 = vpop.permute.xlu0 %163
    %vm165 = vcmask 892736
    %s166 = scalar_lea.vmem [#allocation0], 16
    %167 = vst.msk [vmem:[%s166] sm:$0x1] %vm165, %v164
    %s168 = scalar_lea.vmem %s0, 73
    %v169 = vld [vmem:[%s168] sm:$0x1]
    %170 = vrot.lane.b32.xlu0 %v169, 102
    %v171 = vpop.permute.xlu0 %170
    %vm172 = vcmask 876336
    %s173 = scalar_lea.vmem [#allocation0], 8
    %174 = vst.msk [vmem:[%s173] sm:$0x1] %vm172, %v171
    %s175 = scalar_lea.vmem %s0, 154
    %v176 = vld [vmem:[%s175] sm:$0x1]
    %177 = vrot.lane.b32.xlu0 %v176, 101
    %v178 = vpop.permute.xlu0 %177
    %vm179 = vcmask 868136
    %s180 = scalar_lea.vmem [#allocation0], 24
    %181 = vst.msk [vmem:[%s180] sm:$0x1] %vm179, %v178
    %s182 = scalar_lea.vmem %s0, 32
    %v183 = vld [vmem:[%s182] sm:$0x1]
    %184 = vrot.lane.b32.xlu0 %v183, 100
    %v185 = vpop.permute.xlu0 %184
    %vm186 = vcmask 859936
    %187 = vst.msk [vmem:[#allocation0] sm:$0x1] %vm186, %v185
    %s188 = scalar_lea.vmem %s0, 113
    %v189 = vld [vmem:[%s188] sm:$0x1]
    %190 = vrot.lane.b32.xlu0 %v189, 99
    %v191 = vpop.permute.xlu0 %190
    %vm192 = vcmask 851736
    %s193 = scalar_lea.vmem [#allocation0], 16
    %194 = vst.msk [vmem:[%s193] sm:$0x1] %vm192, %v191
    %s195 = scalar_lea.vmem %s0, 72
    %v196 = vld [vmem:[%s195] sm:$0x1]
    %197 = vrot.lane.b32.xlu0 %v196, 97
    %v198 = vpop.permute.xlu0 %197
    %vm199 = vcmask 835336
    %s200 = scalar_lea.vmem [#allocation0], 8
    %201 = vst.msk [vmem:[%s200] sm:$0x1] %vm199, %v198
    %s202 = scalar_lea.vmem %s0, 153
    %v203 = vld [vmem:[%s202] sm:$0x1]
    %204 = vrot.lane.b32.xlu0 %v203, 96
    %v205 = vpop.permute.xlu0 %204
    %vm206 = vcmask 827136
    %s207 = scalar_lea.vmem [#allocation0], 24
    %208 = vst.msk [vmem:[%s207] sm:$0x1] %vm206, %v205
    %s209 = scalar_lea.vmem %s0, 28
    %v210 = vld [vmem:[%s209] sm:$0x1]
    %211 = vrot.lane.b32.xlu0 %v210, 95
    %v212 = vpop.permute.xlu0 %211
    %vm213 = vcmask 818936
    %214 = vst.msk [vmem:[#allocation0] sm:$0x1] %vm213, %v212
    %s215 = scalar_lea.vmem %s0, 112
    %v216 = vld [vmem:[%s215] sm:$0x1]
    %217 = vrot.lane.b32.xlu0 %v216, 94
    %v218 = vpop.permute.xlu0 %217
    %vm219 = vcmask 810736
    %s220 = scalar_lea.vmem [#allocation0], 16
    %221 = vst.msk [vmem:[%s220] sm:$0x1] %vm219, %v218
    %s222 = scalar_lea.vmem %s0, 68
    %v223 = vld [vmem:[%s222] sm:$0x1]
    %224 = vrot.lane.b32.xlu0 %v223, 92
    %v225 = vpop.permute.xlu0 %224
    %vm226 = vcmask 794336
    %s227 = scalar_lea.vmem [#allocation0], 8
    %228 = vst.msk [vmem:[%s227] sm:$0x1] %vm226, %v225
    %s229 = scalar_lea.vmem %s0, 152
    %v230 = vld [vmem:[%s229] sm:$0x1]
    %231 = vrot.lane.b32.xlu0 %v230, 91
    %v232 = vpop.permute.xlu0 %231
    %vm233 = vcmask 786136
    %s234 = scalar_lea.vmem [#allocation0], 24
    %235 = vst.msk [vmem:[%s234] sm:$0x1] %vm233, %v232
    %s236 = scalar_lea.vmem %s0, 27
    %v237 = vld [vmem:[%s236] sm:$0x1]
    %238 = vrot.lane.b32.xlu0 %v237, 90
    %v239 = vpop.permute.xlu0 %238
    %vm240 = vcmask 777936
    %241 = vst.msk [vmem:[#allocation0] sm:$0x1] %vm240, %v239
    %s242 = scalar_lea.vmem %s0, 108
    %v243 = vld [vmem:[%s242] sm:$0x1]
    %244 = vrot.lane.b32.xlu0 %v243, 89
    %v245 = vpop.permute.xlu0 %244
    %vm246 = vcmask 769736
    %s247 = scalar_lea.vmem [#allocation0], 16
    %248 = vst.msk [vmem:[%s247] sm:$0x1] %vm246, %v245
    %s249 = scalar_lea.vmem %s0, 67
    %v250 = vld [vmem:[%s249] sm:$0x1]
    %251 = vrot.lane.b32.xlu0 %v250, 87
    %v252 = vpop.permute.xlu0 %251
    %vm253 = vcmask 753336
    %s254 = scalar_lea.vmem [#allocation0], 8
    %255 = vst.msk [vmem:[%s254] sm:$0x1] %vm253, %v252
    %s256 = scalar_lea.vmem %s0, 148
    %v257 = vld [vmem:[%s256] sm:$0x1]
    %258 = vrot.lane.b32.xlu0 %v257, 86
    %v259 = vpop.permute.xlu0 %258
    %vm260 = vcmask 745136
    %s261 = scalar_lea.vmem [#allocation0], 24
    %262 = vst.msk [vmem:[%s261] sm:$0x1] %vm260, %v259
    %s263 = scalar_lea.vmem %s0, 26
    %v264 = vld [vmem:[%s263] sm:$0x1]
    %265 = vrot.lane.b32.xlu0 %v264, 85
    %v266 = vpop.permute.xlu0 %265
    %vm267 = vcmask 736936
    %268 = vst.msk [vmem:[#allocation0] sm:$0x1] %vm267, %v266
    %s269 = scalar_lea.vmem %s0, 107
    %v270 = vld [vmem:[%s269] sm:$0x1]
    %271 = vrot.lane.b32.xlu0 %v270, 84
    %v272 = vpop.permute.xlu0 %271
    %vm273 = vcmask 728736
    %s274 = scalar_lea.vmem [#allocation0], 16
    %275 = vst.msk [vmem:[%s274] sm:$0x1] %vm273, %v272
    %s276 = scalar_lea.vmem %s0, 66
    %v277 = vld [vmem:[%s276] sm:$0x1]
    %278 = vrot.lane.b32.xlu0 %v277, 82
    %v279 = vpop.permute.xlu0 %278
    %vm280 = vcmask 712336
    %s281 = scalar_lea.vmem [#allocation0], 8
    %282 = vst.msk [vmem:[%s281] sm:$0x1] %vm280, %v279
    %s283 = scalar_lea.vmem %s0, 147
    %v284 = vld [vmem:[%s283] sm:$0x1]
    %285 = vrot.lane.b32.xlu0 %v284, 81
    %v286 = vpop.permute.xlu0 %285
    %vm287 = vcmask 704136
    %s288 = scalar_lea.vmem [#allocation0], 24
    %289 = vst.msk [vmem:[%s288] sm:$0x1] %vm287, %v286
    %s290 = scalar_lea.vmem %s0, 25
    %v291 = vld [vmem:[%s290] sm:$0x1]
    %292 = vrot.lane.b32.xlu0 %v291, 80
    %v293 = vpop.permute.xlu0 %292
    %vm294 = vcmask 695936
    %295 = vst.msk [vmem:[#allocation0] sm:$0x1] %vm294, %v293
    %s296 = scalar_lea.vmem %s0, 106
    %v297 = vld [vmem:[%s296] sm:$0x1]
    %298 = vrot.lane.b32.xlu0 %v297, 79
    %v299 = vpop.permute.xlu0 %298
    %vm300 = vcmask 687736
    %s301 = scalar_lea.vmem [#allocation0], 16
    %302 = vst.msk [vmem:[%s301] sm:$0x1] %vm300, %v299
    %s303 = scalar_lea.vmem %s0, 65
    %v304 = vld [vmem:[%s303] sm:$0x1]
    %305 = vrot.lane.b32.xlu0 %v304, 77
    %v306 = vpop.permute.xlu0 %305
    %vm307 = vcmask 671336
    %s308 = scalar_lea.vmem [#allocation0], 8
    %309 = vst.msk [vmem:[%s308] sm:$0x1] %vm307, %v306
    %s310 = scalar_lea.vmem %s0, 146
    %v311 = vld [vmem:[%s310] sm:$0x1]
    %312 = vrot.lane.b32.xlu0 %v311, 76
    %v313 = vpop.permute.xlu0 %312
    %vm314 = vcmask 663136
    %s315 = scalar_lea.vmem [#allocation0], 24
    %316 = vst.msk [vmem:[%s315] sm:$0x1] %vm314, %v313
    %s317 = scalar_lea.vmem %s0, 24
    %v318 = vld [vmem:[%s317] sm:$0x1]
    %319 = vrot.lane.b32.xlu0 %v318, 75
    %v320 = vpop.permute.xlu0 %319
    %vm321 = vcmask 654936
    %322 = vst.msk [vmem:[#allocation0] sm:$0x1] %vm321, %v320
    %s323 = scalar_lea.vmem %s0, 105
    %v324 = vld [vmem:[%s323] sm:$0x1]
    %325 = vrot.lane.b32.xlu0 %v324, 74
    %v326 = vpop.permute.xlu0 %325
    %vm327 = vcmask 646736
    %s328 = scalar_lea.vmem [#allocation0], 16
    %329 = vst.msk [vmem:[%s328] sm:$0x1] %vm327, %v326
    %s330 = scalar_lea.vmem %s0, 64
    %v331 = vld [vmem:[%s330] sm:$0x1]
    %332 = vrot.lane.b32.xlu0 %v331, 72
    %v333 = vpop.permute.xlu0 %332
    %vm334 = vcmask 630336
    %s335 = scalar_lea.vmem [#allocation0], 8
    %336 = vst.msk [vmem:[%s335] sm:$0x1] %vm334, %v333
    %s337 = scalar_lea.vmem %s0, 145
    %v338 = vld [vmem:[%s337] sm:$0x1]
    %339 = vrot.lane.b32.xlu0 %v338, 71
    %v340 = vpop.permute.xlu0 %339
    %vm341 = vcmask 622136
    %s342 = scalar_lea.vmem [#allocation0], 24
    %343 = vst.msk [vmem:[%s342] sm:$0x1] %vm341, %v340
    %s344 = scalar_lea.vmem %s0, 20
    %v345 = vld [vmem:[%s344] sm:$0x1]
    %346 = vrot.lane.b32.xlu0 %v345, 70
    %v347 = vpop.permute.xlu0 %346
    %vm348 = vcmask 613936
    %349 = vst.msk [vmem:[#allocation0] sm:$0x1] %vm348, %v347
    %s350 = scalar_lea.vmem %s0, 104
    %v351 = vld [vmem:[%s350] sm:$0x1]
    %352 = vrot.lane.b32.xlu0 %v351, 69
    %v353 = vpop.permute.xlu0 %352
    %vm354 = vcmask 605736
    %s355 = scalar_lea.vmem [#allocation0], 16
    %356 = vst.msk [vmem:[%s355] sm:$0x1] %vm354, %v353
    %s357 = scalar_lea.vmem %s0, 60
    %v358 = vld [vmem:[%s357] sm:$0x1]
    %359 = vrot.lane.b32.xlu0 %v358, 67
    %v360 = vpop.permute.xlu0 %359
    %vm361 = vcmask 589336
    %s362 = scalar_lea.vmem [#allocation0], 8
    %363 = vst.msk [vmem:[%s362] sm:$0x1] %vm361, %v360
    %s364 = scalar_lea.vmem %s0, 144
    %v365 = vld [vmem:[%s364] sm:$0x1]
    %366 = vrot.lane.b32.xlu0 %v365, 66
    %v367 = vpop.permute.xlu0 %366
    %vm368 = vcmask 581136
    %s369 = scalar_lea.vmem [#allocation0], 24
    %370 = vst.msk [vmem:[%s369] sm:$0x1] %vm368, %v367
    %s371 = scalar_lea.vmem %s0, 19
    %v372 = vld [vmem:[%s371] sm:$0x1]
    %373 = vrot.lane.b32.xlu0 %v372, 65
    %v374 = vpop.permute.xlu0 %373
    %vm375 = vcmask 572936
    %376 = vst.msk [vmem:[#allocation0] sm:$0x1] %vm375, %v374
    %s377 = scalar_lea.vmem %s0, 100
    %v378 = vld [vmem:[%s377] sm:$0x1]
    %379 = vrot.lane.b32.xlu0 %v378, 64
    %v380 = vpop.permute.xlu0 %379
    %vm381 = vcmask 564736
    %s382 = scalar_lea.vmem [#allocation0], 16
    %383 = vst.msk [vmem:[%s382] sm:$0x1] %vm381, %v380
    %s384 = scalar_lea.vmem %s0, 59
    %v385 = vld [vmem:[%s384] sm:$0x1]
    %386 = vrot.lane.b32.xlu0 %v385, 62
    %v387 = vpop.permute.xlu0 %386
    %vm388 = vcmask 548336
    %s389 = scalar_lea.vmem [#allocation0], 8
    %390 = vst.msk [vmem:[%s389] sm:$0x1] %vm388, %v387
    %s391 = scalar_lea.vmem %s0, 140
    %v392 = vld [vmem:[%s391] sm:$0x1]
    %393 = vrot.lane.b32.xlu0 %v392, 61
    %v394 = vpop.permute.xlu0 %393
    %vm395 = vcmask 540136
    %s396 = scalar_lea.vmem [#allocation0], 24
    %397 = vst.msk [vmem:[%s396] sm:$0x1] %vm395, %v394
    %s398 = scalar_lea.vmem %s0, 18
    %v399 = vld [vmem:[%s398] sm:$0x1]
    %400 = vrot.lane.b32.xlu0 %v399, 60
    %v401 = vpop.permute.xlu0 %400
    %vm402 = vcmask 531936
    %403 = vst.msk [vmem:[#allocation0] sm:$0x1] %vm402, %v401
    %s404 = scalar_lea.vmem %s0, 99
    %v405 = vld [vmem:[%s404] sm:$0x1]
    %406 = vrot.lane.b32.xlu0 %v405, 59
    %v407 = vpop.permute.xlu0 %406
    %vm408 = vcmask 523736
    %s409 = scalar_lea.vmem [#allocation0], 16
    %410 = vst.msk [vmem:[%s409] sm:$0x1] %vm408, %v407
    %s411 = scalar_lea.vmem %s0, 58
    %v412 = vld [vmem:[%s411] sm:$0x1]
    %413 = vrot.lane.b32.xlu0 %v412, 57
    %v414 = vpop.permute.xlu0 %413
    %vm415 = vcmask 507336
    %s416 = scalar_lea.vmem [#allocation0], 8
    %417 = vst.msk [vmem:[%s416] sm:$0x1] %vm415, %v414
    %s418 = scalar_lea.vmem %s0, 139
    %v419 = vld [vmem:[%s418] sm:$0x1]
    %420 = vrot.lane.b32.xlu0 %v419, 56
    %v421 = vpop.permute.xlu0 %420
    %vm422 = vcmask 499136
    %s423 = scalar_lea.vmem [#allocation0], 24
    %424 = vst.msk [vmem:[%s423] sm:$0x1] %vm422, %v421
    %s425 = scalar_lea.vmem %s0, 17
    %v426 = vld [vmem:[%s425] sm:$0x1]
    %427 = vrot.lane.b32.xlu0 %v426, 55
    %v428 = vpop.permute.xlu0 %427
    %vm429 = vcmask 490936
    %430 = vst.msk [vmem:[#allocation0] sm:$0x1] %vm429, %v428
    %s431 = scalar_lea.vmem %s0, 98
    %v432 = vld [vmem:[%s431] sm:$0x1]
    %433 = vrot.lane.b32.xlu0 %v432, 54
    %v434 = vpop.permute.xlu0 %433
    %vm435 = vcmask 482736
    %s436 = scalar_lea.vmem [#allocation0], 16
    %437 = vst.msk [vmem:[%s436] sm:$0x1] %vm435, %v434
    %s438 = scalar_lea.vmem %s0, 57
    %v439 = vld [vmem:[%s438] sm:$0x1]
    %440 = vrot.lane.b32.xlu0 %v439, 52
    %v441 = vpop.permute.xlu0 %440
    %vm442 = vcmask 466336
    %s443 = scalar_lea.vmem [#allocation0], 8
    %444 = vst.msk [vmem:[%s443] sm:$0x1] %vm442, %v441
    %s445 = scalar_lea.vmem %s0, 138
    %v446 = vld [vmem:[%s445] sm:$0x1]
    %447 = vrot.lane.b32.xlu0 %v446, 51
    %v448 = vpop.permute.xlu0 %447
    %vm449 = vcmask 458136
    %s450 = scalar_lea.vmem [#allocation0], 24
    %451 = vst.msk [vmem:[%s450] sm:$0x1] %vm449, %v448
    %s452 = scalar_lea.vmem %s0, 16
    %v453 = vld [vmem:[%s452] sm:$0x1]
    %454 = vrot.lane.b32.xlu0 %v453, 50
    %v455 = vpop.permute.xlu0 %454
    %vm456 = vcmask 449936
    %457 = vst.msk [vmem:[#allocation0] sm:$0x1] %vm456, %v455
    %s458 = scalar_lea.vmem %s0, 97
    %v459 = vld [vmem:[%s458] sm:$0x1]
    %460 = vrot.lane.b32.xlu0 %v459, 49
    %v461 = vpop.permute.xlu0 %460
    %vm462 = vcmask 441736
    %s463 = scalar_lea.vmem [#allocation0], 16
    %464 = vst.msk [vmem:[%s463] sm:$0x1] %vm462, %v461
    %s465 = scalar_lea.vmem %s0, 56
    %v466 = vld [vmem:[%s465] sm:$0x1]
    %467 = vrot.lane.b32.xlu0 %v466, 47
    %v468 = vpop.permute.xlu0 %467
    %vm469 = vcmask 425336
    %s470 = scalar_lea.vmem [#allocation0], 8
    %471 = vst.msk [vmem:[%s470] sm:$0x1] %vm469, %v468
    %s472 = scalar_lea.vmem %s0, 137
    %v473 = vld [vmem:[%s472] sm:$0x1]
    %474 = vrot.lane.b32.xlu0 %v473, 46
    %v475 = vpop.permute.xlu0 %474
    %vm476 = vcmask 417136
    %s477 = scalar_lea.vmem [#allocation0], 24
    %478 = vst.msk [vmem:[%s477] sm:$0x1] %vm476, %v475
    %s479 = scalar_lea.vmem %s0, 12
    %v480 = vld [vmem:[%s479] sm:$0x1]
    %481 = vrot.lane.b32.xlu0 %v480, 45
    %v482 = vpop.permute.xlu0 %481
    %vm483 = vcmask 408936
    %484 = vst.msk [vmem:[#allocation0] sm:$0x1] %vm483, %v482
    %s485 = scalar_lea.vmem %s0, 96
    %v486 = vld [vmem:[%s485] sm:$0x1]
    %487 = vrot.lane.b32.xlu0 %v486, 44
    %v488 = vpop.permute.xlu0 %487
    %vm489 = vcmask 400736
    %s490 = scalar_lea.vmem [#allocation0], 16
    %491 = vst.msk [vmem:[%s490] sm:$0x1] %vm489, %v488
    %s492 = scalar_lea.vmem %s0, 52
    %v493 = vld [vmem:[%s492] sm:$0x1]
    %494 = vrot.lane.b32.xlu0 %v493, 42
    %v495 = vpop.permute.xlu0 %494
    %vm496 = vcmask 384336
    %s497 = scalar_lea.vmem [#allocation0], 8
    %498 = vst.msk [vmem:[%s497] sm:$0x1] %vm496, %v495
    %s499 = scalar_lea.vmem %s0, 136
    %v500 = vld [vmem:[%s499] sm:$0x1]
    %501 = vrot.lane.b32.xlu0 %v500, 41
    %v502 = vpop.permute.xlu0 %501
    %vm503 = vcmask 376136
    %s504 = scalar_lea.vmem [#allocation0], 24
    %505 = vst.msk [vmem:[%s504] sm:$0x1] %vm503, %v502
    %s506 = scalar_lea.vmem %s0, 11
    %v507 = vld [vmem:[%s506] sm:$0x1]
    %508 = vrot.lane.b32.xlu0 %v507, 40
    %v509 = vpop.permute.xlu0 %508
    %vm510 = vcmask 367936
    %511 = vst.msk [vmem:[#allocation0] sm:$0x1] %vm510, %v509
    %s512 = scalar_lea.vmem %s0, 92
    %v513 = vld [vmem:[%s512] sm:$0x1]
    %514 = vrot.lane.b32.xlu0 %v513, 39
    %v515 = vpop.permute.xlu0 %514
    %vm516 = vcmask 359736
    %s517 = scalar_lea.vmem [#allocation0], 16
    %518 = vst.msk [vmem:[%s517] sm:$0x1] %vm516, %v515
    %s519 = scalar_lea.vmem %s0, 51
    %v520 = vld [vmem:[%s519] sm:$0x1]
    %521 = vrot.lane.b32.xlu0 %v520, 37
    %v522 = vpop.permute.xlu0 %521
    %vm523 = vcmask 343336
    %s524 = scalar_lea.vmem [#allocation0], 8
    %525 = vst.msk [vmem:[%s524] sm:$0x1] %vm523, %v522
    %s526 = scalar_lea.vmem %s0, 132
    %v527 = vld [vmem:[%s526] sm:$0x1]
    %528 = vrot.lane.b32.xlu0 %v527, 36
    %v529 = vpop.permute.xlu0 %528
    %vm530 = vcmask 335136
    %s531 = scalar_lea.vmem [#allocation0], 24
    %532 = vst.msk [vmem:[%s531] sm:$0x1] %vm530, %v529
    %s533 = scalar_lea.vmem %s0, 10
    %v534 = vld [vmem:[%s533] sm:$0x1]
    %535 = vrot.lane.b32.xlu0 %v534, 35
    %v536 = vpop.permute.xlu0 %535
    %vm537 = vcmask 326936
    %538 = vst.msk [vmem:[#allocation0] sm:$0x1] %vm537, %v536
    %s539 = scalar_lea.vmem %s0, 91
    %v540 = vld [vmem:[%s539] sm:$0x1]
    %541 = vrot.lane.b32.xlu0 %v540, 34
    %v542 = vpop.permute.xlu0 %541
    %vm543 = vcmask 318736
    %s544 = scalar_lea.vmem [#allocation0], 16
    %545 = vst.msk [vmem:[%s544] sm:$0x1] %vm543, %v542
    %s546 = scalar_lea.vmem %s0, 172
    %v547 = vld [vmem:[%s546] sm:$0x1]
    %548 = vrot.lane.b32.xlu0 %v547, 33
    %v549 = vpop.permute.xlu0 %548
    %vm550 = vcmask 310536
    %s551 = scalar_lea.vmem [#allocation0], 32
    %552 = vst.msk [vmem:[%s551] sm:$0x1] %vm550, %v549
    %s553 = scalar_lea.vmem %s0, 50
    %v554 = vld [vmem:[%s553] sm:$0x1]
    %555 = vrot.lane.b32.xlu0 %v554, 32
    %v556 = vpop.permute.xlu0 %555
    %vm557 = vcmask 302336
    %s558 = scalar_lea.vmem [#allocation0], 8
    %559 = vst.msk [vmem:[%s558] sm:$0x1] %vm557, %v556
    %s560 = scalar_lea.vmem %s0, 131
    %v561 = vld [vmem:[%s560] sm:$0x1]
    %562 = vrot.lane.b32.xlu0 %v561, 31
    %v563 = vpop.permute.xlu0 %562
    %vm564 = vcmask 294136
    %s565 = scalar_lea.vmem [#allocation0], 24
    %566 = vst.msk [vmem:[%s565] sm:$0x1] %vm564, %v563
    %s567 = scalar_lea.vmem %s0, 9
    %v568 = vld [vmem:[%s567] sm:$0x1]
    %569 = vrot.lane.b32.xlu0 %v568, 30
    %v570 = vpop.permute.xlu0 %569
    %vm571 = vcmask 285936
    %572 = vst.msk [vmem:[#allocation0] sm:$0x1] %vm571, %v570
    %s573 = scalar_lea.vmem %s0, 90
    %v574 = vld [vmem:[%s573] sm:$0x1]
    %575 = vrot.lane.b32.xlu0 %v574, 29
    %v576 = vpop.permute.xlu0 %575
    %vm577 = vcmask 277736
    %s578 = scalar_lea.vmem [#allocation0], 16
    %579 = vst.msk [vmem:[%s578] sm:$0x1] %vm577, %v576
    %s580 = scalar_lea.vmem %s0, 171
    %v581 = vld [vmem:[%s580] sm:$0x1]
    %582 = vrot.lane.b32.xlu0 %v581, 28
    %v583 = vpop.permute.xlu0 %582
    %vm584 = vcmask 269536
    %s585 = scalar_lea.vmem [#allocation0], 32
    %586 = vst.msk [vmem:[%s585] sm:$0x1] %vm584, %v583
    %s587 = scalar_lea.vmem %s0, 49
    %v588 = vld [vmem:[%s587] sm:$0x1]
    %589 = vrot.lane.b32.xlu0 %v588, 27
    %v590 = vpop.permute.xlu0 %589
    %vm591 = vcmask 261336
    %s592 = scalar_lea.vmem [#allocation0], 8
    %593 = vst.msk [vmem:[%s592] sm:$0x1] %vm591, %v590
    %s594 = scalar_lea.vmem %s0, 130
    %v595 = vld [vmem:[%s594] sm:$0x1]
    %596 = vrot.lane.b32.xlu0 %v595, 26
    %v597 = vpop.permute.xlu0 %596
    %vm598 = vcmask 253136
    %s599 = scalar_lea.vmem [#allocation0], 24
    %600 = vst.msk [vmem:[%s599] sm:$0x1] %vm598, %v597
    %s601 = scalar_lea.vmem %s0, 8
    %v602 = vld [vmem:[%s601] sm:$0x1]
    %603 = vrot.lane.b32.xlu0 %v602, 25
    %v604 = vpop.permute.xlu0 %603
    %vm605 = vcmask 244936
    %606 = vst.msk [vmem:[#allocation0] sm:$0x1] %vm605, %v604
    %s607 = scalar_lea.vmem %s0, 89
    %v608 = vld [vmem:[%s607] sm:$0x1]
    %609 = vrot.lane.b32.xlu0 %v608, 24
    %v610 = vpop.permute.xlu0 %609
    %vm611 = vcmask 236736
    %s612 = scalar_lea.vmem [#allocation0], 16
    %613 = vst.msk [vmem:[%s612] sm:$0x1] %vm611, %v610
    %s614 = scalar_lea.vmem %s0, 170
    %v615 = vld [vmem:[%s614] sm:$0x1]
    %616 = vrot.lane.b32.xlu0 %v615, 23
    %v617 = vpop.permute.xlu0 %616
    %vm618 = vcmask 228536
    %s619 = scalar_lea.vmem [#allocation0], 32
    %620 = vst.msk [vmem:[%s619] sm:$0x1] %vm618, %v617
    %s621 = scalar_lea.vmem %s0, 48
    %v622 = vld [vmem:[%s621] sm:$0x1]
    %623 = vrot.lane.b32.xlu0 %v622, 22
    %v624 = vpop.permute.xlu0 %623
    %vm625 = vcmask 220336
    %s626 = scalar_lea.vmem [#allocation0], 8
    %627 = vst.msk [vmem:[%s626] sm:$0x1] %vm625, %v624
    %s628 = scalar_lea.vmem %s0, 129
    %v629 = vld [vmem:[%s628] sm:$0x1]
    %630 = vrot.lane.b32.xlu0 %v629, 21
    %v631 = vpop.permute.xlu0 %630
    %vm632 = vcmask 212136
    %s633 = scalar_lea.vmem [#allocation0], 24
    %634 = vst.msk [vmem:[%s633] sm:$0x1] %vm632, %v631
    %s635 = scalar_lea.vmem %s0, 4
    %v636 = vld [vmem:[%s635] sm:$0x1]
    %637 = vrot.lane.b32.xlu0 %v636, 20
    %v638 = vpop.permute.xlu0 %637
    %vm639 = vcmask 203936
    %640 = vst.msk [vmem:[#allocation0] sm:$0x1] %vm639, %v638
    %s641 = scalar_lea.vmem %s0, 88
    %v642 = vld [vmem:[%s641] sm:$0x1]
    %643 = vrot.lane.b32.xlu0 %v642, 19
    %v644 = vpop.permute.xlu0 %643
    %vm645 = vcmask 195736
    %s646 = scalar_lea.vmem [#allocation0], 16
    %647 = vst.msk [vmem:[%s646] sm:$0x1] %vm645, %v644
    %s648 = scalar_lea.vmem %s0, 169
    %v649 = vld [vmem:[%s648] sm:$0x1]
    %650 = vrot.lane.b32.xlu0 %v649, 18
    %v651 = vpop.permute.xlu0 %650
    %vm652 = vcmask 187536
    %s653 = scalar_lea.vmem [#allocation0], 32
    %654 = vst.msk [vmem:[%s653] sm:$0x1] %vm652, %v651
    %s655 = scalar_lea.vmem %s0, 44
    %v656 = vld [vmem:[%s655] sm:$0x1]
    %657 = vrot.lane.b32.xlu0 %v656, 17
    %v658 = vpop.permute.xlu0 %657
    %vm659 = vcmask 179336
    %s660 = scalar_lea.vmem [#allocation0], 8
    %661 = vst.msk [vmem:[%s660] sm:$0x1] %vm659, %v658
    %s662 = scalar_lea.vmem %s0, 128
    %v663 = vld [vmem:[%s662] sm:$0x1]
    %664 = vrot.lane.b32.xlu0 %v663, 16
    %v665 = vpop.permute.xlu0 %664
    %vm666 = vcmask 171136
    %s667 = scalar_lea.vmem [#allocation0], 24
    %668 = vst.msk [vmem:[%s667] sm:$0x1] %vm666, %v665
    %s669 = scalar_lea.vmem %s0, 3
    %v670 = vld [vmem:[%s669] sm:$0x1]
    %671 = vrot.lane.b32.xlu0 %v670, 15
    %v672 = vpop.permute.xlu0 %671
    %vm673 = vcmask 162936
    %674 = vst.msk [vmem:[#allocation0] sm:$0x1] %vm673, %v672
    %s675 = scalar_lea.vmem %s0, 84
    %v676 = vld [vmem:[%s675] sm:$0x1]
    %677 = vrot.lane.b32.xlu0 %v676, 14
    %v678 = vpop.permute.xlu0 %677
    %vm679 = vcmask 154736
    %s680 = scalar_lea.vmem [#allocation0], 16
    %681 = vst.msk [vmem:[%s680] sm:$0x1] %vm679, %v678
    %s682 = scalar_lea.vmem %s0, 168
    %v683 = vld [vmem:[%s682] sm:$0x1]
    %684 = vrot.lane.b32.xlu0 %v683, 13
    %v685 = vpop.permute.xlu0 %684
    %vm686 = vcmask 146536
    %s687 = scalar_lea.vmem [#allocation0], 32
    %688 = vst.msk [vmem:[%s687] sm:$0x1] %vm686, %v685
    %s689 = scalar_lea.vmem %s0, 43
    %v690 = vld [vmem:[%s689] sm:$0x1]
    %691 = vrot.lane.b32.xlu0 %v690, 12
    %v692 = vpop.permute.xlu0 %691
    %vm693 = vcmask 138336
    %s694 = scalar_lea.vmem [#allocation0], 8
    %695 = vst.msk [vmem:[%s694] sm:$0x1] %vm693, %v692
    %s696 = scalar_lea.vmem %s0, 124
    %v697 = vld [vmem:[%s696] sm:$0x1]
    %698 = vrot.lane.b32.xlu0 %v697, 11
    %v699 = vpop.permute.xlu0 %698
    %vm700 = vcmask 130136
    %s701 = scalar_lea.vmem [#allocation0], 24
    %702 = vst.msk [vmem:[%s701] sm:$0x1] %vm700, %v699
    %s703 = scalar_lea.vmem %s0, 2
    %v704 = vld [vmem:[%s703] sm:$0x1]
    %705 = vrot.lane.b32.xlu0 %v704, 10
    %v706 = vpop.permute.xlu0 %705
    %vm707 = vcmask 121936
    %708 = vst.msk [vmem:[#allocation0] sm:$0x1] %vm707, %v706
    %s709 = scalar_lea.vmem %s0, 83
    %v710 = vld [vmem:[%s709] sm:$0x1]
    %711 = vrot.lane.b32.xlu0 %v710, 9
    %v712 = vpop.permute.xlu0 %711
    %vm713 = vcmask 113736
    %s714 = scalar_lea.vmem [#allocation0], 16
    %715 = vst.msk [vmem:[%s714] sm:$0x1] %vm713, %v712
    %s716 = scalar_lea.vmem %s0, 164
    %v717 = vld [vmem:[%s716] sm:$0x1]
    %718 = vrot.lane.b32.xlu0 %v717, 8
    %v719 = vpop.permute.xlu0 %718
    %vm720 = vcmask 105536
    %s721 = scalar_lea.vmem [#allocation0], 32
    %722 = vst.msk [vmem:[%s721] sm:$0x1] %vm720, %v719
    %s723 = scalar_lea.vmem %s0, 42
    %v724 = vld [vmem:[%s723] sm:$0x1]
    %725 = vrot.lane.b32.xlu0 %v724, 7
    %v726 = vpop.permute.xlu0 %725
    %vm727 = vcmask 97336
    %s728 = scalar_lea.vmem [#allocation0], 8
    %729 = vst.msk [vmem:[%s728] sm:$0x1] %vm727, %v726
    %s730 = scalar_lea.vmem %s0, 123
    %v731 = vld [vmem:[%s730] sm:$0x1]
    %732 = vrot.lane.b32.xlu0 %v731, 6
    %v733 = vpop.permute.xlu0 %732
    %vm734 = vcmask 89136
    %s735 = scalar_lea.vmem [#allocation0], 24
    %736 = vst.msk [vmem:[%s735] sm:$0x1] %vm734, %v733
    %s737 = scalar_lea.vmem %s0, 1
    %v738 = vld [vmem:[%s737] sm:$0x1]
    %739 = vrot.lane.b32.xlu0 %v738, 5
    %v740 = vpop.permute.xlu0 %739
    %vm741 = vcmask 80936
    %742 = vst.msk [vmem:[#allocation0] sm:$0x1] %vm741, %v740
    %s743 = scalar_lea.vmem %s0, 82
    %v744 = vld [vmem:[%s743] sm:$0x1]
    %745 = vrot.lane.b32.xlu0 %v744, 4
    %v746 = vpop.permute.xlu0 %745
    %vm747 = vcmask 72736
    %s748 = scalar_lea.vmem [#allocation0], 16
    %749 = vst.msk [vmem:[%s748] sm:$0x1] %vm747, %v746
    %s750 = scalar_lea.vmem %s0, 163
    %v751 = vld [vmem:[%s750] sm:$0x1]
    %752 = vrot.lane.b32.xlu0 %v751, 3
    %v753 = vpop.permute.xlu0 %752
    %vm754 = vcmask 64536
    %s755 = scalar_lea.vmem [#allocation0], 32
    %756 = vst.msk [vmem:[%s755] sm:$0x1] %vm754, %v753
    %s757 = scalar_lea.vmem %s0, 41
    %v758 = vld [vmem:[%s757] sm:$0x1]
    %759 = vrot.lane.b32.xlu0 %v758, 2
    %v760 = vpop.permute.xlu0 %759
    %vm761 = vcmask 56336
    %s762 = scalar_lea.vmem [#allocation0], 8
    %763 = vst.msk [vmem:[%s762] sm:$0x1] %vm761, %v760
    %s764 = scalar_lea.vmem %s0, 122
    %v765 = vld [vmem:[%s764] sm:$0x1]
    %766 = vrot.lane.b32.xlu0 %v765, 1
    %v767 = vpop.permute.xlu0 %766
    %vm768 = vcmask 48136
    %s769 = scalar_lea.vmem [#allocation0], 24
    %770 = vst.msk [vmem:[%s769] sm:$0x1] %vm768, %v767
    %s772 = sshllo.u32 0, 1
    %v774 = vld [vmem:[#allocation0] sm:%s772]
    %s775 = sshllo.u32 0, 1
    %776 = vst [vmem:[%s1] sm:%s775] %v774
    %s777 = scalar_lea.vmem [#allocation0], 8
    %v778 = vld [vmem:[%s777] sm:%s772]
    %s779 = sshllo.u32 0, 1
    %s780 = scalar_lea.vmem %s1, 1
    %781 = vst [vmem:[%s780] sm:%s779] %v778
    %s782 = scalar_lea.vmem [#allocation0], 16
    %v783 = vld [vmem:[%s782] sm:%s772]
    %s784 = sshllo.u32 0, 1
    %s785 = smul.addr 1, 2
    %s786 = scalar_lea.vmem %s1, %s785
    %787 = vst [vmem:[%s786] sm:%s784] %v783
    %s788 = scalar_lea.vmem [#allocation0], 24
    %v789 = vld [vmem:[%s788] sm:%s772]
    %s790 = sshllo.u32 0, 1
    %s791 = smul.addr 1, 3
    %s792 = scalar_lea.vmem %s1, %s791
    %793 = vst [vmem:[%s792] sm:%s790] %v789
    %s794 = scalar_lea.vmem [#allocation0], 32
    %v795 = vld [vmem:[%s794] sm:%s772]
    %s796 = sshllo.u32 0, 1
    %s797 = smul.addr 1, 4
    %s798 = scalar_lea.vmem %s1, %s797
    %799 = vst [vmem:[%s798] sm:%s796] %v795

// kernel: conv_gelu_forward.1
$region0: #{conv_gelu_forward.1}
  #allocation0 [shape = 'u32[]', space=smem, size = 0x4, offset = 0x4, fixed_abs, tag = 'smem constant byte address 0x4 - core index']
  #allocation1 [shape = 'u32[144,128]{1,0:T(1,128)}', space=vmem, size = 0x12000, scoped, tag = 'internal scratch']
  %s0 = inlined_call_operand.vmem [shape: f32[1,640], index: 0, kind: input, shape index: {}]
  %s1 = inlined_call_operand.vmem [shape: f32[13,640], index: 1, kind: input, shape index: {}]
  %s2 = inlined_call_operand.vmem [shape: f32[13,1], index: 2, kind: input, shape index: {}]
  %s3 = inlined_call_operand.vmem [shape: f32[13,9], index: 3, kind: output, shape index: {}]
  %s4 = sld [smem:[#allocation0]]
  $region22: #{conv_gelu_forward.1} parent=0
    _
  %s6 = ssub.s32 1, %s4
  %s7 = scalar_select 0, %s6, %s4
  // Predicated region
  $region2: #{conv_gelu_forward.1} parent=0 // pred_check
    _
  $region3: #{conv_gelu_forward.1} parent=0 // pred_check_branch
    %9 = sbr.rel (0) target = $region5
  $region4: #{conv_gelu_forward.1} parent=0 // pred_region
    _
  $region5: #{conv_gelu_forward.1} parent=0 // pred_fallthru
    _
  // Predicated region
  $region6: #{conv_gelu_forward.1} parent=0 // pred_check
    _
  $region7: #{conv_gelu_forward.1} parent=0 // pred_check_branch
    %11 = sbr.rel (0) target = $region9
  $region8: #{conv_gelu_forward.1} parent=0 // pred_region
    _
  $region9: #{conv_gelu_forward.1} parent=0 // pred_fallthru
    _
  // Predicated region
  $region10: #{conv_gelu_forward.1} parent=0 // pred_check
    _
  $region11: #{conv_gelu_forward.1} parent=0 // pred_check_branch
    %13 = sbr.rel (0) target = $region13
  $region12: #{conv_gelu_forward.1} parent=0 // pred_region
    _
  $region13: #{conv_gelu_forward.1} parent=0 // pred_fallthru
    _
  %v14 = vld [vmem:[%s1] sm:$0xff]
  %v15 = vld [vmem:[%s1 + $0x8] sm:$0xff]
  %v16 = vld [vmem:[%s1 + $0x10] sm:$0xff]
  %v17 = vld [vmem:[%s1 + $0x18] sm:$0xff]
  %v18 = vld [vmem:[%s1 + $0x20] sm:$0xff]
  %v19 = vld [vmem:[%s1 + $0x28] sm:$0x1f]
  %v20 = vld [vmem:[%s1 + $0x30] sm:$0x1f]
  %v21 = vld [vmem:[%s1 + $0x38] sm:$0x1f]
  %v22 = vld [vmem:[%s1 + $0x40] sm:$0x1f]
  %v23 = vld [vmem:[%s1 + $0x48] sm:$0x1f]
  %v24 = vld [vmem:[%s0] sm:$0x1f]
  %v26 = vlaneseq
  %v27 = vshrl.u32 %v26, 7
  %v28 = vsub.s32 0, %v27
  %v29 = vrot.slane %v24, %v28
  %v30 = vlaneseq
  %v31 = vshrl.u32 %v30, 7
  %v32 = vsub.s32 1, %v31
  %v33 = vrot.slane %v24, %v32
  %v34 = vlaneseq
  %v35 = vshrl.u32 %v34, 7
  %v36 = vsub.s32 2, %v35
  %v37 = vrot.slane %v24, %v36
  %v38 = vlaneseq
  %v39 = vshrl.u32 %v38, 7
  %v40 = vsub.s32 3, %v39
  %v41 = vrot.slane %v24, %v40
  %v42 = vlaneseq
  %v43 = vshrl.u32 %v42, 7
  %v44 = vsub.s32 4, %v43
  %v45 = vrot.slane %v24, %v44
  %v51 = vmul.f32 %v14, %v29
  %v52 = vmul.f32 %v15, %v33
  %v53 = vmul.f32 %v16, %v37
  %v54 = vmul.f32 %v17, %v41
  %v55 = vmul.f32 %v18, %v45
  %v56 = vmul.f32 %v19, %v29
  %v57 = vmul.f32 %v20, %v33
  %v58 = vmul.f32 %v21, %v37
  %v59 = vmul.f32 %v22, %v41
  %v60 = vmul.f32 %v23, %v45
  %v61 = vadd.f32 %v51, %v52
  %v62 = vadd.f32 %v61, %v53
  %v63 = vadd.f32 %v62, %v54
  %v64 = vadd.f32 %v63, %v55
  %65 = vadd.xlane.f32.xlu0 %v64
  %v66 = vpop.xlane.xlu0 %65
  %vm67 = vcmask 1044480
  %v68 = vsel %vm67, %v56, 0.0
  %v69 = vsel %vm67, %v57, 0.0
  %v70 = vadd.f32 %v68, %v69
  %v71 = vsel %vm67, %v58, 0.0
  %v72 = vadd.f32 %v70, %v71
  %v73 = vsel %vm67, %v59, 0.0
  %v74 = vadd.f32 %v72, %v73
  %v75 = vsel %vm67, %v60, 0.0
  %v76 = vadd.f32 %v74, %v75
  %77 = vadd.xlane.f32.xlu0 %v76
  %v78 = vpop.xlane.xlu0 %77
  %v79 = vlaneseq
  %v80 = vand.u32 %v79, 127
  %v81 = vld [vmem:[%s2] sm:$0xff]
  %v82 = vld [vmem:[%s2 + $0x8] sm:$0x1f]
  %vm83 = vcmp.eq.s32.totalorder %v80, 4
  %v84 = vsel %vm83, %v66, 0.0
  %v85 = vsel %vm83, %v78, 0.0
  %87 = vset.pattern.permute.xlu0 0
  %88 = vperm.xlu0 %87, %v81
  %v89 = vpop.permute.xlu0 %88
  %92 = vset.pattern.permute.xlu0 0
  %93 = vperm.xlu0 %92, %v82
  %v94 = vpop.permute.xlu0 %93
  %v96 = vadd.f32 %v89, %v84
  %v97 = vadd.f32 %v94, %v85
  %v98 = vmul.f32 %v96, 0.5
  %v99 = vmul.f32 %v97, 0.5
  %v100 = vmul.f32 %v96, %v96
  %v101 = vmul.f32 %v97, %v97
  %v102 = vmul.f32 %v100, %v96
  %v103 = vmul.f32 %v101, %v97
  %v104 = vmul.f32 %v102, 0.044715
  %v105 = vmul.f32 %v103, 0.044715
  %v106 = vadd.f32 %v96, %v104
  %v107 = vadd.f32 %v97, %v105
  %v108 = vmul.f32 %v106, 0.7978846
  %v109 = vmul.f32 %v107, 0.7978846
  %v110 = vtanh.pop %v108
  %v111 = vtanh.pop %v109
  %v112 = vadd.f32 %v110, 1.0
  %v113 = vadd.f32 %v111, 1.0
  %v114 = vmul.f32 %v98, %v112
  %v115 = vmul.f32 %v99, %v113
  %vm116 = vcmask 72704
  %117 = vst.msk [vmem:[%s3] sm:$0xff] %vm116, %v114
  %vm118 = vcmask 69632
  %119 = vst.msk [vmem:[%s3 + $0x8] sm:$0x1f] %vm118, %v115
  // Predicated region
  $region14: #{conv_gelu_forward.1} parent=0 // pred_check
    _
  $region15: #{conv_gelu_forward.1} parent=0 // pred_check_branch
    %121 = sbr.rel (0) target = $region17
  $region16: #{conv_gelu_forward.1} parent=0 // pred_region
    _
  $region17: #{conv_gelu_forward.1} parent=0 // pred_fallthru
    _
  // Predicated region
  $region18: #{conv_gelu_forward.1} parent=0 // pred_check
    _
  $region19: #{conv_gelu_forward.1} parent=0 // pred_check_branch
    %123 = sbr.rel (0) target = $region21
  $region20: #{conv_gelu_forward.1} parent=0 // pred_region
    _
  $region21: #{conv_gelu_forward.1} parent=0 // pred_fallthru
    _

</llo_original>
